<compile_context>
chip_gen: v7x
topology: tpu7x:2x2x1
jax: 0.10.0
libtpu: 0.0.40
codegen_flags: <defaults>
</compile_context>

<pallas_src>
import functools

import jax
import jax.numpy as jnp
from jax import lax
from jax.experimental import pallas as pl
from jax.experimental.pallas import tpu as pltpu

_VMEM_LIMIT = 48 * 1024 * 1024  # < v7x 64 MiB physical, > all scoped defaults


def _round_up(x, m):
    return (x + m - 1) // m * m


def _fit_tile(size, default):
    """Pick a tile and padded extent. `default` is (8,128)-aligned; if the dim
    fits in one tile we use the full (possibly unaligned) dim as the block."""
    if size <= default:
        return size, size
    return default, _round_up(size, default)


# ----------------------------------------------------------------------------
# Tiled projection matmul:  x (M, K) @ w (K, N) -> (M, N)
# bf16 operands, f32 VMEM accumulator, reduction axis last ("arbitrary").
# ----------------------------------------------------------------------------
def _matmul_kernel(x_ref, w_ref, o_ref, acc_ref):
    @pl.when(pl.program_id(2) == 0)
    def _():
        acc_ref[...] = jnp.zeros_like(acc_ref)

    acc_ref[...] += jnp.dot(x_ref[...], w_ref[...],
                            preferred_element_type=jnp.float32)

    @pl.when(pl.program_id(2) == pl.num_programs(2) - 1)
    def _():
        o_ref[...] = acc_ref[...].astype(o_ref.dtype)


def matmul_pallas(x, w, *, tm=512, tn=512, tk=1024, out_dtype=jnp.float32):
    """x: (M, K), w: (K, N) -> (M, N); zero-pads ragged dims, slices result."""
    M, K = x.shape
    K2, N = w.shape
    assert K == K2

    tm, Mp = _fit_tile(M, tm)
    tn, Np = _fit_tile(N, tn)
    tk, Kp = _fit_tile(K, tk)

    if (Mp, Kp) != (M, K):
        x = jnp.pad(x, ((0, Mp - M), (0, Kp - K)))
    if (Kp, Np) != (K, N):
        w = jnp.pad(w, ((0, Kp - K), (0, Np - N)))

    grid = (Mp // tm, Np // tn, Kp // tk)
    out = pl.pallas_call(
        _matmul_kernel,
        out_shape=jax.ShapeDtypeStruct((Mp, Np), out_dtype),
        grid_spec=pltpu.PrefetchScalarGridSpec(
            num_scalar_prefetch=0,
            grid=grid,
            in_specs=[
                pl.BlockSpec((tm, tk), lambda i, j, k: (i, k)),
                pl.BlockSpec((tk, tn), lambda i, j, k: (k, j)),
            ],
            out_specs=pl.BlockSpec((tm, tn), lambda i, j, k: (i, j)),
            scratch_shapes=[pltpu.VMEM((tm, tn), jnp.float32)],
        ),
        compiler_params=pltpu.CompilerParams(
            dimension_semantics=("parallel", "parallel", "arbitrary"),
            vmem_limit_bytes=_VMEM_LIMIT,
        ),
    )(x, w)
    return out[:M, :N] if (Mp, Np) != (M, N) else out


# ----------------------------------------------------------------------------
# Flash-style attention core: grid (B, H, Nq, Nkv), online softmax in f32
# scratch, normalization deferred past P@V.  q arrives pre-scaled (scale is
# folded into the qkv weight by the wrapper).
# ----------------------------------------------------------------------------
def _flash_attn_kernel(q_ref, k_ref, v_ref, o_ref, m_sc, l_sc, acc_sc):
    kv = pl.program_id(3)

    @pl.when(kv == 0)
    def _():
        m_sc[...] = jnp.full_like(m_sc, -jnp.inf)
        l_sc[...] = jnp.zeros_like(l_sc)
        acc_sc[...] = jnp.zeros_like(acc_sc)

    q = q_ref[0, 0]                                    # (tq, d)  bf16
    k = k_ref[0, 0]                                    # (tkv, d) bf16
    # scores: contract last dims of q and k (no explicit k.T)
    s = lax.dot_general(q, k, (((1,), (1,)), ((), ())),
                        preferred_element_type=jnp.float32)   # (tq, tkv) f32

    m_prev = m_sc[...]
    m_new = jnp.maximum(m_prev, jnp.max(s, axis=-1, keepdims=True))
    alpha = jnp.exp(m_prev - m_new)                    # rescale prior partials
    p = jnp.exp(s - m_new)                             # unnormalized probs

    l_sc[...] = alpha * l_sc[...] + jnp.sum(p, axis=-1, keepdims=True)
    acc_sc[...] = alpha * acc_sc[...] + jnp.dot(
        p.astype(v_ref.dtype), v_ref[0, 0], preferred_element_type=jnp.float32)
    m_sc[...] = m_new

    @pl.when(kv == pl.num_programs(3) - 1)
    def _():
        # Softmax normalization deferred past P@V: one (tq, d) scale, EUP recip.
        o_ref[0, 0] = (acc_sc[...] *
                       pl.reciprocal(l_sc[...], approx=True)).astype(o_ref.dtype)


def flash_attention_pallas(q, k, v, *, tq=256, tkv=256):
    """q, k, v: (B, H, N, d) with scale pre-folded into q -> out (B, H, N, d)."""
    B, H, N, d = q.shape
    # TODO(synk): masked ragged tiles so N not divisible by the tile still tiles.
    if N % tq != 0:
        tq = N
    if N % tkv != 0:
        tkv = N
    tq, tkv = min(tq, N), min(tkv, N)
    grid = (B, H, N // tq, N // tkv)

    return pl.pallas_call(
        _flash_attn_kernel,
        out_shape=jax.ShapeDtypeStruct((B, H, N, d), q.dtype),
        grid_spec=pltpu.PrefetchScalarGridSpec(
            num_scalar_prefetch=0,
            grid=grid,
            in_specs=[
                pl.BlockSpec((1, 1, tq, d), lambda b, h, qi, ki: (b, h, qi, 0)),
                pl.BlockSpec((1, 1, tkv, d), lambda b, h, qi, ki: (b, h, ki, 0)),
                pl.BlockSpec((1, 1, tkv, d), lambda b, h, qi, ki: (b, h, ki, 0)),
            ],
            out_specs=pl.BlockSpec((1, 1, tq, d), lambda b, h, qi, ki: (b, h, qi, 0)),
            scratch_shapes=[
                pltpu.VMEM((tq, 1), jnp.float32),     # running max
                pltpu.VMEM((tq, 1), jnp.float32),     # running denom
                pltpu.VMEM((tq, d), jnp.float32),     # running output
            ],
        ),
        compiler_params=pltpu.CompilerParams(
            dimension_semantics=("parallel", "parallel", "parallel", "arbitrary"),
            vmem_limit_bytes=_VMEM_LIMIT,
        ),
    )(q, k, v)


# ----------------------------------------------------------------------------
# Full module forward
# ----------------------------------------------------------------------------
def attention_forward(x, w_qkv, w_out, *, heads, dim_head):
    """
    x:      (B, N, dim)
    w_qkv:  (3 * heads * dim_head, dim)   -- PyTorch Linear weight layout (out, in)
    w_out:  (dim, heads * dim_head)       -- PyTorch Linear weight layout (out, in)
    """
    B, N, dim = x.shape
    inner = heads * dim_head
    scale = dim_head ** -0.5
    project_out = not (heads == 1 and dim_head == dim)

    # Fold the softmax scale into the q rows of the qkv weight (free at runtime),
    # pre-transpose both weights once, and cast operands to bf16 for the MXU.
    w_qkv_t = (w_qkv.at[:inner, :].multiply(scale)).T.astype(jnp.bfloat16)  # (dim, 3*inner)
    w_out_t = w_out.T.astype(jnp.bfloat16)                                   # (inner, dim)
    x_bf16 = x.astype(jnp.bfloat16)

    # to_qkv (bias=False); keep the intermediate in bf16 (half the HBM bytes).
    qkv = matmul_pallas(x_bf16.reshape(B * N, dim), w_qkv_t,
                        out_dtype=jnp.bfloat16)                              # (B*N, 3*inner)

    # One-time wrapper relayout: 'b n (three h d) -> three b h n d'.
    qkv = qkv.reshape(B, N, 3, heads, dim_head).transpose(2, 0, 3, 1, 4)
    q, k, v = qkv[0], qkv[1], qkv[2]                                         # (B, H, N, d) bf16

    out = flash_attention_pallas(q, k, v)                                    # (B, H, N, d) bf16

    # merge heads: 'b h n d -> (b n) (h d)'
    out = out.transpose(0, 2, 1, 3).reshape(B * N, inner)

    if not project_out:                                # to_out == nn.Identity()
        return out.reshape(B, N, inner).astype(x.dtype)

    # to_out Linear; dropout p=0.0 -> identity.
    # TODO(synk): fuse this projection into the attention epilogue to skip the
    # (B, N, inner) HBM round trip (needs a cross-head reduction axis).
    y = matmul_pallas(out, w_out_t, out_dtype=jnp.float32)                   # (B*N, dim)
    return y.reshape(B, N, dim)


# ----------------------------------------------------------------------------
# Pure-JAX f32 reference for sanity checking
# ----------------------------------------------------------------------------
def attention_reference(x, w_qkv, w_out, *, heads, dim_head):
    B, N, dim = x.shape
    inner = heads * dim_head
    scale = dim_head ** -0.5
    qkv = x @ w_qkv.T
    q, k, v = jnp.split(qkv, 3, axis=-1)
    to_heads = lambda t: t.reshape(B, N, heads, dim_head).transpose(0, 2, 1, 3)
    q, k, v = to_heads(q), to_heads(k), to_heads(v)
    dots = jnp.einsum("bhnd,bhmd->bhnm", q, k) * scale
    attn = jax.nn.softmax(dots, axis=-1)
    out = jnp.einsum("bhnm,bhmd->bhnd", attn, v)
    out = out.transpose(0, 2, 1, 3).reshape(B, N, inner)
    return out @ w_out.T


if __name__ == "__main__":
    # Small shapes consistent with the module's forward.
    B, N, dim = 2, 8, 32
    heads, dim_head = 2, 16
    inner_dim = heads * dim_head

    key = jax.random.PRNGKey(0)
    kx, kqkv, kout = jax.random.split(key, 3)

    x = jax.random.normal(kx, (B, N, dim), dtype=jnp.float32)
    # PyTorch Linear layout: (out_features, in_features)
    w_qkv = jax.random.normal(kqkv, (3 * inner_dim, dim), dtype=jnp.float32) * 0.05
    w_out = jax.random.normal(kout, (dim, inner_dim), dtype=jnp.float32) * 0.05

    y = attention_forward(x, w_qkv, w_out, heads=heads, dim_head=dim_head)
    jax.block_until_ready(y)

    y_ref = attention_reference(x, w_qkv, w_out, heads=heads, dim_head=dim_head)
    assert y.shape == (B, N, dim)
    # bf16 MXU operands + approx softmax reciprocal -> loosened tolerance vs f32 ref.
    assert jnp.allclose(y, y_ref, atol=2e-2, rtol=2e-2), "mismatch vs reference"

    print("KERNEL_OK")
</pallas_src>

<mosaic_0001>
module attributes {stable_mosaic.version = 11 : i64} {
  func.func @_matmul_kernel(%arg0: i32, %arg1: i32, %arg2: i32, %arg3: memref<16x32xbf16, #tpu.memory_space<vmem>>, %arg4: memref<32x96xbf16, #tpu.memory_space<vmem>>, %arg5: memref<16x96xbf16, #tpu.memory_space<vmem>>, %arg6: memref<16x96xf32, #tpu.memory_space<vmem>>) attributes {dimension_semantics = [#tpu.dimension_semantics<parallel>, #tpu.dimension_semantics<parallel>, #tpu.dimension_semantics<arbitrary>], iteration_bounds = array<i64: 1, 1, 1>, scalar_prefetch = 0 : i64, scratch_operands = 1 : i64, tpu.core_type = #tpu.core_type<tc>, window_params = [{transform_indices = @transform_0, window_bounds = array<i64: 16, 32>}, {transform_indices = @transform_1, window_bounds = array<i64: 32, 96>}, {transform_indices = @transform_2, window_bounds = array<i64: 16, 96>}]} {
    %c0_i32 = arith.constant 0 : i32
    %0 = arith.cmpi eq, %arg2, %c0_i32 : i32
    %1 = arith.extui %0 : i1 to i32
    %c0_i32_0 = arith.constant 0 : i32
    %2 = arith.cmpi ne, %1, %c0_i32_0 : i32
    scf.if %2 {
      %cst_10 = arith.constant 0.000000e+00 : f32
      %12 = vector.broadcast %cst_10 : f32 to vector<16x96xf32>
      %c0_11 = arith.constant 0 : index
      %c0_12 = arith.constant 0 : index
      %13 = vector.load %arg6[%c0_11, %c0_12] : memref<16x96xf32, #tpu.memory_space<vmem>>, vector<16x96xf32>
      tpu.vector_store %arg6[%c0_11, %c0_12], %12 {strides = array<i32>} : memref<16x96xf32, #tpu.memory_space<vmem>>, vector<16x96xf32>,
    } else {
    }
    %c0 = arith.constant 0 : index
    %c0_1 = arith.constant 0 : index
    %3 = vector.load %arg6[%c0, %c0_1] : memref<16x96xf32, #tpu.memory_space<vmem>>, vector<16x96xf32>
    %c0_2 = arith.constant 0 : index
    %c0_3 = arith.constant 0 : index
    %4 = vector.load %arg3[%c0_2, %c0_3] : memref<16x32xbf16, #tpu.memory_space<vmem>>, vector<16x32xbf16>
    %c0_4 = arith.constant 0 : index
    %c0_5 = arith.constant 0 : index
    %5 = vector.load %arg4[%c0_4, %c0_5] : memref<32x96xbf16, #tpu.memory_space<vmem>>, vector<32x96xbf16>
    %cst = arith.constant dense<0.000000e+00> : vector<16x96xf32>
    %6 = tpu.matmul %4, %5, %cst {dimension_numbers = #tpu.dot_dimension_numbers<[1], [0], [0], [1], [0, 0, 1, 1], [], []>} : vector<16x32xbf16>, vector<32x96xbf16>, vector<16x96xf32> -> vector<16x96xf32>
    %7 = arith.addf %3, %6 : vector<16x96xf32>
    %c0_6 = arith.constant 0 : index
    %c0_7 = arith.constant 0 : index
    %8 = vector.load %arg6[%c0_6, %c0_7] : memref<16x96xf32, #tpu.memory_space<vmem>>, vector<16x96xf32>
    tpu.vector_store %arg6[%c0_6, %c0_7], %7 {strides = array<i32>} : memref<16x96xf32, #tpu.memory_space<vmem>>, vector<16x96xf32>,
    %c0_i32_8 = arith.constant 0 : i32
    %9 = arith.cmpi eq, %arg2, %c0_i32_8 : i32
    %10 = arith.extui %9 : i1 to i32
    %c0_i32_9 = arith.constant 0 : i32
    %11 = arith.cmpi ne, %10, %c0_i32_9 : i32
    scf.if %11 {
      %c0_10 = arith.constant 0 : index
      %c0_11 = arith.constant 0 : index
      %12 = vector.load %arg6[%c0_10, %c0_11] : memref<16x96xf32, #tpu.memory_space<vmem>>, vector<16x96xf32>
      %13 = arith.truncf %12 : vector<16x96xf32> to vector<16x96xbf16>
      %c0_12 = arith.constant 0 : index
      %c0_13 = arith.constant 0 : index
      %14 = vector.load %arg5[%c0_12, %c0_13] : memref<16x96xbf16, #tpu.memory_space<vmem>>, vector<16x96xbf16>
      tpu.vector_store %arg5[%c0_12, %c0_13], %13 {strides = array<i32>} : memref<16x96xbf16, #tpu.memory_space<vmem>>, vector<16x96xbf16>,
    } else {
    }
    return
  }
  func.func @transform_0(%arg0: i32, %arg1: i32, %arg2: i32) -> (i32, i32) {
    %c0_i32 = arith.constant 0 : i32
    return %arg0, %arg2 : i32, i32
  }
  func.func @transform_1(%arg0: i32, %arg1: i32, %arg2: i32) -> (i32, i32) {
    %c0_i32 = arith.constant 0 : i32
    return %arg2, %arg1 : i32, i32
  }
  func.func @transform_2(%arg0: i32, %arg1: i32, %arg2: i32) -> (i32, i32) {
    %c0_i32 = arith.constant 0 : i32
    return %arg0, %arg1 : i32, i32
  }
}

</mosaic_0001>

<llo_original>
// kernel: tpu_custom_call.1
$region0: #{tpu_custom_call.1}
  #allocation0 [shape = 'u32[]', space=smem, size = 0x4, offset = 0x4, fixed_abs, tag = 'smem constant byte address 0x4 - core index']
  #allocation1 [shape = 'u32[144,128]{1,0:T(1,128)}', space=vmem, size = 0x12000, scoped, tag = 'internal scratch']
  #allocation2 [shape = 'f32[16,96]{1,0:T(8,128)}', space=vmem, size = 0x2000, scoped, tag = 'scratch operand']
  %s0 = inlined_call_operand.hbm [shape: bf16[16,32], index: 0, kind: input, shape index: {}]
  %s1 = inlined_call_operand.hbm [shape: bf16[32,96], index: 1, kind: input, shape index: {}]
  %s2 = inlined_call_operand.hbm [shape: bf16[16,96], index: 2, kind: output, shape index: {}]
  %s3 = sld [smem:[#allocation0]]
  $region34: #{tpu_custom_call.1} parent=0
    _
  %s5 = ssub.s32 1, %s3
  %s6 = scalar_select 0, %s5, %s3
  $region1: #{tpu_custom_call.1} parent=0
    #allocation3 [shape = 'u8[4096]{0}', space=vmem, size = 0x1000, scoped, tag = 'input window, operand 0, single buffered']
    #allocation4 [shape = 's32[1]{0}', space=sflag, size = 0x4, scoped, tag = 'scoped memory for tpu_custom_call.1']
    #allocation5 [shape = 's32[1]{0}', space=sflag, size = 0x4, scoped, tag = 'scoped memory for tpu_custom_call.1']
    #allocation6 [shape = 'u8[8192]{0}', space=vmem, size = 0x2000, scoped, tag = 'input window, operand 1, single buffered']
    #allocation7 [shape = 's32[1]{0}', space=sflag, size = 0x4, scoped, tag = 'scoped memory for tpu_custom_call.1']
    #allocation8 [shape = 'u8[4096]{0}', space=vmem, size = 0x1000, scoped, tag = 'output window, operand 0, single buffered']
    %7 = vsyncpa [#allocation4], 0
    %8 = vsyncpa [#allocation7], 0
    %9 = vsyncpa [#allocation5], 0
    // Predicated region
    $region2: #{tpu_custom_call.1} parent=1 // pred_check
      _
    $region3: #{tpu_custom_call.1} parent=1 // pred_check_branch
      %11 = sbr.rel (0) target = $region5
    $region4: #{tpu_custom_call.1} parent=1 // pred_region
      %s13 = ssub.s32 128, 128
      %14 = vsyncadd [#allocation4], %s13
      %s15 = sshll.u32 [#allocation3], 4
      %s16 = int_to_ptr.vmem [resolvable:$true] %s15
      %21 = dma.hbm_to_vmem [thread:$0]  %s0, 128, %s16, [#allocation4], 64, 64, 4
    $region5: #{tpu_custom_call.1} parent=1 // pred_fallthru
      _
    // Predicated region
    $region6: #{tpu_custom_call.1} parent=1 // pred_check
      _
    $region7: #{tpu_custom_call.1} parent=1 // pred_check_branch
      %23 = sbr.rel (0) target = $region9
    $region8: #{tpu_custom_call.1} parent=1 // pred_region
      %s25 = ssub.s32 256, 256
      %26 = vsyncadd [#allocation7], %s25
      %s27 = sshll.u32 [#allocation6], 4
      %s28 = int_to_ptr.vmem [resolvable:$true] %s27
      %33 = dma.hbm_to_vmem [thread:$0]  %s1, 256, %s28, [#allocation7], 64, 64, 4
    $region9: #{tpu_custom_call.1} parent=1 // pred_fallthru
      _
    // Predicated region
    $region10: #{tpu_custom_call.1} parent=1 // pred_check
      _
    $region11: #{tpu_custom_call.1} parent=1 // pred_check_branch
      %35 = sbr.rel (0) target = $region13
    $region12: #{tpu_custom_call.1} parent=1 // pred_region
      %36 = dma.done [#allocation4], 128
    $region13: #{tpu_custom_call.1} parent=1 // pred_fallthru
      _
    // Predicated region
    $region14: #{tpu_custom_call.1} parent=1 // pred_check
      _
    $region15: #{tpu_custom_call.1} parent=1 // pred_check_branch
      %38 = sbr.rel (0) target = $region17
    $region16: #{tpu_custom_call.1} parent=1 // pred_region
      %39 = dma.done [#allocation7], 256
    $region17: #{tpu_custom_call.1} parent=1 // pred_fallthru
      _
    %p41 = scmp.eq.s32.totalorder 0, 0
    // Predicated region
    $region18: #{tpu_custom_call.1} parent=1 // pred_check
      %p42 = pneg %p41
    $region19: #{tpu_custom_call.1} parent=1 // pred_check_branch
      %44 = sbr.rel (%p42) target = $region21
    $region20: #{tpu_custom_call.1} parent=1 // pred_region
      %vm45 = vcmask 785408
      %46 = vst.msk [vmem:[#allocation2] sm:$0xff] %vm45, 0.0
      %47 = vst.msk [vmem:[#allocation2 + $0x8] sm:$0xff] %vm45, 0.0
    $region21: #{tpu_custom_call.1} parent=1 // pred_fallthru
      _
    %v48 = vld [vmem:[#allocation2] sm:$0xff]
    %v49 = vld [vmem:[#allocation2 + $0x8] sm:$0xff]
    %v50 = vld [vmem:[#allocation3] sm:$0xf]
    %v51 = vld [vmem:[#allocation3 + $0x4] sm:$0xf]
    %v52 = vld [vmem:[#allocation6] sm:$0xf]
    %v53 = vld [vmem:[#allocation6 + $0x4] sm:$0xf]
    %v54 = vld [vmem:[#allocation6 + $0x8] sm:$0xf]
    %v55 = vld [vmem:[#allocation6 + $0xc] sm:$0xf]
    %v58 = vunpack.c.l.b16 %v50
    %v59 = vunpack.c.l.b16 %v51
    %v60 = vpack.c.b16 %v59, %v58
    %v65 = vunpack.c.l.b16 %v52
    %v66 = vunpack.c.l.b16 %v53
    %v67 = vunpack.c.l.b16 %v54
    %v68 = vunpack.c.l.b16 %v55
    %v69 = vpack.c.b16 %v66, %v65
    %v70 = vpack.c.b16 %v68, %v67
    %vm73 = vcmask 261120
    %v75 = vsel %vm73, %v60, 0
    %77 = vmatprep.subr.bf16.mxu0 0
    %78 = vmatpush1.bf16.msra.mxu0 %v69
    %79 = vmatprep.subr.bf16.mxu0 0
    %80 = vmatpush1.bf16.msra.mxu0 %v70
    %81 = vmatprep.subr.bf16.mxu0 0
    %82 = vmatpush1.bf16.msra.mxu0 0
    %83 = vmatprep.subr.bf16.mxu0 0
    %84 = vmatpush1.bf16.msra.mxu0 0
    %85 = vmatprep.subr.bf16.mxu0 0
    %86 = vmatpush1.bf16.msra.mxu0 0
    %87 = vmatprep.subr.bf16.mxu0 0
    %88 = vmatpush1.bf16.msra.mxu0 0
    %89 = vmatprep.subr.bf16.mxu0 0
    %90 = vmatpush1.bf16.msra.mxu0 0
    %91 = vmatprep.subr.bf16.mxu0 0
    %92 = vmatpush1.bf16.msra.mxu0 0
    %93 = vmatprep.subr.bf16.mxu0 0
    %94 = vmatpush1.bf16.msra.mxu0 0
    %95 = vmatprep.subr.bf16.mxu0 0
    %96 = vmatpush1.bf16.msra.mxu0 0
    %97 = vmatprep.subr.bf16.mxu0 0
    %98 = vmatpush1.bf16.msra.mxu0 0
    %99 = vmatprep.subr.bf16.mxu0 0
    %100 = vmatpush1.bf16.msra.mxu0 0
    %101 = vmatprep.subr.bf16.mxu0 0
    %102 = vmatpush1.bf16.msra.mxu0 0
    %103 = vmatprep.subr.bf16.mxu0 0
    %104 = vmatpush1.bf16.msra.mxu0 0
    %105 = vmatprep.subr.bf16.mxu0 0
    %106 = vmatpush1.bf16.msra.mxu0 0
    %107 = vmatprep.subr.bf16.mxu0 0
    %108 = vmatpush1.bf16.msra.mxu0 0
    %109 = vmatprep.mubr.bf16.mxu0 0
    %110 = vmatmul.mubr.bf16.gmra.mrb[0].mxu0 %v75
    %v111 = vpop.f32.mrb[0].mxu0
    %v112 = vadd.f32 0.0, %v111
    %v113 = vpop.f32.mrb[0].mxu0
    %v114 = vpop.f32.mrb[0].mxu0
    %v115 = vadd.f32 0.0, %v114
    %v116 = vpop.f32.mrb[0].mxu0
    %117 = vdwg.mxu0
    %v118 = vadd.f32 %v48, %v112
    %v119 = vadd.f32 %v49, %v115
    %vm120 = vcmask 785408
    %121 = vst.msk [vmem:[#allocation2] sm:$0xff] %vm120, %v118
    %122 = vst.msk [vmem:[#allocation2 + $0x8] sm:$0xff] %vm120, %v119
    // Predicated region
    $region22: #{tpu_custom_call.1} parent=1 // pred_check
      %p123 = pneg %p41
    $region23: #{tpu_custom_call.1} parent=1 // pred_check_branch
      %125 = sbr.rel (%p123) target = $region25
    $region24: #{tpu_custom_call.1} parent=1 // pred_region
      %v126 = vld [vmem:[#allocation2] sm:$0xff]
      %v127 = vld [vmem:[#allocation2 + $0x8] sm:$0xff]
      %v128 = vpack.c.bf16 %v127, %v126
      %v130 = vunpack.c.l.b16 %v128
      %v131 = vunpack.c.h.b16 %v128
      %v132 = vpack.c.b16 %v130, %v130
      %v133 = vpack.c.b16 %v131, %v131
      %vm136 = vcmask 781312
      %137 = vst.msk [vmem:[#allocation8] sm:$0xf] %vm136, %v132
      %138 = vst.msk [vmem:[#allocation8 + $0x4] sm:$0xf] %vm136, %v133
    $region25: #{tpu_custom_call.1} parent=1 // pred_fallthru
      _
    // Predicated region
    $region26: #{tpu_custom_call.1} parent=1 // pred_check
      _
    $region27: #{tpu_custom_call.1} parent=1 // pred_check_branch
      %140 = sbr.rel (0) target = $region29
    $region28: #{tpu_custom_call.1} parent=1 // pred_region
      %s142 = ssub.s32 128, 128
      %143 = vsyncadd [#allocation5], %s142
      %s144 = sshll.u32 [#allocation8], 4
      %s145 = int_to_ptr.vmem [resolvable:$true] %s144
      %150 = dma.vmem_to_hbm [thread:$0]  %s145, 128, %s2, [#allocation5], 64, 64, 4
    $region29: #{tpu_custom_call.1} parent=1 // pred_fallthru
      _
    // Predicated region
    $region30: #{tpu_custom_call.1} parent=1 // pred_check
      _
    $region31: #{tpu_custom_call.1} parent=1 // pred_check_branch
      %152 = sbr.rel (0) target = $region33
    $region32: #{tpu_custom_call.1} parent=1 // pred_region
      %153 = dma.done [#allocation5], 128
    $region33: #{tpu_custom_call.1} parent=1 // pred_fallthru
      _
    %154 = vsyncpa [#allocation4], 1
    %155 = vsyncpa [#allocation7], 1
    %156 = vsyncpa [#allocation5], 1

</llo_original>
